<compile_context>
chip_gen: v7x
topology: tpu7x:2x2x1
jax: 0.10.0
libtpu: 0.0.40
codegen_flags: <defaults>
</compile_context>

<pallas_src>
import jax
import jax.numpy as jnp
import numpy as np
from jax import lax
from jax.experimental import pallas as pl
from jax.experimental.pallas import tpu as pltpu

EPS = 1e-8
_VMEM_BUDGET = 12 * 1024 * 1024   # 4 live buffers must fit under v5e's 16 MiB default
_MAX_TILE_LANES = 2048            # diminishing returns beyond ~1-2k lanes (85-86% roofline)


def _pixelnorm_kernel(x_ref, o_ref):
    # x_ref / o_ref: (B_TILE, C, TILE_HW) block in VMEM.
    x = x_ref[...].astype(jnp.float32)            # f32 math even for bf16 I/O
    inv_c = jnp.float32(1.0 / x_ref.shape[1])     # constant-folded 1/C
    # mean over channels: one cross-sublane XLU reduce + one VPU mul
    m = jnp.sum(x, axis=1, keepdims=True) * inv_c
    # rsqrt goes to the EUP; multiply is VPU.  Padded lanes (x == 0) stay 0.
    o_ref[...] = (x * lax.rsqrt(m + EPS)).astype(o_ref.dtype)


def _round_up(a: int, b: int) -> int:
    return ((a + b - 1) // b) * b


def _largest_divisor_leq(n: int, cap: int) -> int:
    cap = max(1, min(n, cap))
    for d in range(cap, 0, -1):
        if n % d == 0:
            return d
    return 1


def _choose_tiles(N: int, C: int, HW: int, itemsize: int):
    """Pick (b_tile, tile_hw, hw_pad) so 4 live buffers fit the VMEM budget."""
    hw128 = _round_up(HW, 128)
    # Largest lane tile (multiple of 128) such that 4 * C * tile_hw * itemsize fits.
    lanes_cap = _VMEM_BUDGET // (4 * C * itemsize)
    lanes_cap = max(128, (lanes_cap // 128) * 128)
    tile_hw = min(_MAX_TILE_LANES, lanes_cap, hw128)
    hw_pad = _round_up(HW, tile_hw)
    # Block extra batch elements per step when a single (C, tile_hw) slab is small.
    b_cap = _VMEM_BUDGET // (4 * C * tile_hw * itemsize)
    b_tile = _largest_divisor_leq(N, max(1, b_cap))
    return b_tile, tile_hw, hw_pad


def pixel_norm(x: jax.Array) -> jax.Array:
    """x: (N, C, H, W) float32 or bfloat16 -> same shape/dtype."""
    N, C, H, W = x.shape
    HW = H * W
    itemsize = jnp.dtype(x.dtype).itemsize
    b_tile, tile_hw, hw_pad = _choose_tiles(N, C, HW, itemsize)

    x_flat = x.reshape(N, C, HW)
    if hw_pad != HW:
        # Zero-pad lanes: padded columns give 0 * rsqrt(0 + eps) = 0, no NaNs,
        # and the channel-mean is unaffected (reduction is over C, not HW).
        x_flat = jnp.pad(x_flat, ((0, 0), (0, 0), (0, hw_pad - HW)))

    grid = (N // b_tile, hw_pad // tile_hw)
    spec = pl.BlockSpec((b_tile, C, tile_hw), lambda b, h: (b, 0, h))

    out_flat = pl.pallas_call(
        _pixelnorm_kernel,
        out_shape=jax.ShapeDtypeStruct((N, C, hw_pad), x.dtype),
        grid_spec=pltpu.PrefetchScalarGridSpec(
            num_scalar_prefetch=0,
            grid=grid,
            in_specs=[spec],
            out_specs=spec,
        ),
        compiler_params=pltpu.CompilerParams(
            # No cross-step reduction -> both axes parallel (shards over v7x's 2 TCs).
            dimension_semantics=("parallel", "parallel"),
        ),
    )(x_flat)

    if hw_pad != HW:
        out_flat = out_flat[:, :, :HW]
    return out_flat.reshape(N, C, H, W)


if __name__ == "__main__":
    key = jax.random.PRNGKey(0)
    # Keep values positive so mean(x)+eps > 0 (the reference module uses mean(x),
    # not mean(x**2); rsqrt of a negative mean would be NaN in both frameworks).
    x = jax.random.uniform(key, (2, 4, 16, 16), dtype=jnp.float32,
                           minval=0.1, maxval=1.0)

    out = jax.block_until_ready(pixel_norm(x))

    # Pure-JAX reference.
    ref = x * lax.rsqrt(jnp.mean(x, axis=1, keepdims=True) + EPS)
    np.testing.assert_allclose(np.asarray(out), np.asarray(ref),
                               rtol=1e-5, atol=1e-5)

    print("KERNEL_OK")
</pallas_src>

<mosaic_0001>
module attributes {stable_mosaic.version = 11 : i64} {
  func.func @_pixelnorm_kernel(%arg0: i32, %arg1: i32, %arg2: memref<2x4x256xf32, #tpu.memory_space<vmem>>, %arg3: memref<2x4x256xf32, #tpu.memory_space<vmem>>) attributes {dimension_semantics = [#tpu.dimension_semantics<parallel>, #tpu.dimension_semantics<parallel>], iteration_bounds = array<i64: 1, 1>, scalar_prefetch = 0 : i64, scratch_operands = 0 : i64, tpu.core_type = #tpu.core_type<tc>, window_params = [{transform_indices = @transform_0, window_bounds = array<i64: 2, 4, 256>}, {transform_indices = @transform_1, window_bounds = array<i64: 2, 4, 256>}]} {
    %c0 = arith.constant 0 : index
    %c0_0 = arith.constant 0 : index
    %c0_1 = arith.constant 0 : index
    %0 = vector.load %arg2[%c0, %c0_0, %c0_1] : memref<2x4x256xf32, #tpu.memory_space<vmem>>, vector<2x4x256xf32>
    %cst = arith.constant dense<0.000000e+00> : vector<2x256xf32>
    %1 = vector.multi_reduction <add>, %0, %cst [1] : vector<2x4x256xf32> to vector<2x256xf32>
    %2 = vector.shape_cast %1 : vector<2x256xf32> to vector<2x1x256xf32>
    %cst_2 = arith.constant 2.500000e-01 : f32
    %3 = vector.broadcast %cst_2 : f32 to vector<2x1x256xf32>
    %4 = arith.mulf %2, %3 : vector<2x1x256xf32>
    %cst_3 = arith.constant 9.99999993E-9 : f32
    %5 = vector.broadcast %cst_3 : f32 to vector<2x1x256xf32>
    %6 = arith.addf %4, %5 : vector<2x1x256xf32>
    %7 = math.rsqrt %6 : vector<2x1x256xf32>
    %8 = vector.broadcast %7 : vector<2x1x256xf32> to vector<2x4x256xf32>
    %9 = arith.mulf %0, %8 : vector<2x4x256xf32>
    %c0_4 = arith.constant 0 : index
    %c0_5 = arith.constant 0 : index
    %c0_6 = arith.constant 0 : index
    %10 = vector.load %arg3[%c0_4, %c0_5, %c0_6] : memref<2x4x256xf32, #tpu.memory_space<vmem>>, vector<2x4x256xf32>
    tpu.vector_store %arg3[%c0_4, %c0_5, %c0_6], %9 {strides = array<i32>} : memref<2x4x256xf32, #tpu.memory_space<vmem>>, vector<2x4x256xf32>,
    return
  }
  func.func @transform_0(%arg0: i32, %arg1: i32) -> (i32, i32, i32) {
    %c0_i32 = arith.constant 0 : i32
    %c0_i32_0 = arith.constant 0 : i32
    return %arg0, %c0_i32, %arg1 : i32, i32, i32
  }
  func.func @transform_1(%arg0: i32, %arg1: i32) -> (i32, i32, i32) {
    %c0_i32 = arith.constant 0 : i32
    %c0_i32_0 = arith.constant 0 : i32
    return %arg0, %c0_i32, %arg1 : i32, i32, i32
  }
}

</mosaic_0001>

<llo_original>
// kernel: tpu_custom_call.1
$region0: #{tpu_custom_call.1}
  #allocation0 [shape = 'u32[]', space=smem, size = 0x4, offset = 0x4, fixed_abs, tag = 'smem constant byte address 0x4 - core index']
  #allocation1 [shape = 'u32[144,128]{1,0:T(1,128)}', space=vmem, size = 0x12000, scoped, tag = 'internal scratch']
  %s0 = inlined_call_operand.hbm [shape: f32[2,4,256], index: 0, kind: input, shape index: {}]
  %s1 = inlined_call_operand.hbm [shape: f32[2,4,256], index: 1, kind: output, shape index: {}]
  %s2 = sld [smem:[#allocation0]]
  $region18: #{tpu_custom_call.1} parent=0
    _
  %s4 = ssub.s32 1, %s2
  %s5 = scalar_select 0, %s4, %s2
  $region1: #{tpu_custom_call.1} parent=0
    #allocation2 [shape = 'u8[8192]{0}', space=vmem, size = 0x2000, scoped, tag = 'input window, operand 0, single buffered']
    #allocation3 [shape = 's32[1]{0}', space=sflag, size = 0x4, scoped, tag = 'scoped memory for tpu_custom_call.1']
    #allocation4 [shape = 's32[1]{0}', space=sflag, size = 0x4, scoped, tag = 'scoped memory for tpu_custom_call.1']
    #allocation5 [shape = 'u8[8192]{0}', space=vmem, size = 0x2000, scoped, tag = 'output window, operand 0, single buffered']
    %6 = vsyncpa [#allocation3], 0
    %7 = vsyncpa [#allocation4], 0
    // Predicated region
    $region2: #{tpu_custom_call.1} parent=1 // pred_check
      _
    $region3: #{tpu_custom_call.1} parent=1 // pred_check_branch
      %9 = sbr.rel (0) target = $region5
    $region4: #{tpu_custom_call.1} parent=1 // pred_region
      %s11 = ssub.s32 256, 256
      %12 = vsyncadd [#allocation3], %s11
      %s13 = sshll.u32 [#allocation2], 4
      %s14 = int_to_ptr.vmem [resolvable:$true] %s13
      %19 = dma.hbm_to_vmem [thread:$0]  %s0, 256, %s14, [#allocation3], 128, 128, 8
    $region5: #{tpu_custom_call.1} parent=1 // pred_fallthru
      _
    // Predicated region
    $region6: #{tpu_custom_call.1} parent=1 // pred_check
      _
    $region7: #{tpu_custom_call.1} parent=1 // pred_check_branch
      %21 = sbr.rel (0) target = $region9
    $region8: #{tpu_custom_call.1} parent=1 // pred_region
      %22 = dma.done [#allocation3], 256
    $region9: #{tpu_custom_call.1} parent=1 // pred_fallthru
      _
    %v23 = vld [vmem:[#allocation2] sm:$0xff]
    %v24 = vld [vmem:[#allocation2 + $0x8] sm:$0xff]
    %v27 = vcombine.high %v23, %v23
    %v28 = vcombine.high %v24, %v24
    %vm31 = vcmask 1043456
    %v32 = vsel %vm31, %v23, 0.0
    %v33 = vrot.slane %v32, 4
    %v34 = vadd.f32 %v32, %v33
    %v35 = vrot.slane %v34, 2
    %v36 = vadd.f32 %v34, %v35
    %v37 = vrot.slane %v36, 1
    %v38 = vadd.f32 %v36, %v37
    %v39 = vsel %vm31, %v27, 0.0
    %v40 = vrot.slane %v39, 4
    %v41 = vadd.f32 %v39, %v40
    %v42 = vrot.slane %v41, 2
    %v43 = vadd.f32 %v41, %v42
    %v44 = vrot.slane %v43, 1
    %v45 = vadd.f32 %v43, %v44
    %v46 = vsel %vm31, %v24, 0.0
    %v47 = vrot.slane %v46, 4
    %v48 = vadd.f32 %v46, %v47
    %v49 = vrot.slane %v48, 2
    %v50 = vadd.f32 %v48, %v49
    %v51 = vrot.slane %v50, 1
    %v52 = vadd.f32 %v50, %v51
    %v53 = vsel %vm31, %v28, 0.0
    %v54 = vrot.slane %v53, 4
    %v55 = vadd.f32 %v53, %v54
    %v56 = vrot.slane %v55, 2
    %v57 = vadd.f32 %v55, %v56
    %v58 = vrot.slane %v57, 1
    %v59 = vadd.f32 %v57, %v58
    %v60 = vmul.f32 %v38, 0.25
    %v61 = vmul.f32 %v45, 0.25
    %v62 = vmul.f32 %v52, 0.25
    %v63 = vmul.f32 %v59, 0.25
    %v64 = vadd.f32 %v60, 1e-08
    %v65 = vadd.f32 %v61, 1e-08
    %v66 = vadd.f32 %v62, 1e-08
    %v67 = vadd.f32 %v63, 1e-08
    %v68 = vrsqrt.pop %v64
    %v69 = vrsqrt.pop %v65
    %v70 = vrsqrt.pop %v66
    %v71 = vrsqrt.pop %v67
    %v76 = vcombine.low %v68, %v69
    %v77 = vcombine.low %v70, %v71
    %v80 = vmul.f32 %v23, %v76
    %v81 = vmul.f32 %v24, %v77
    %82 = vst [vmem:[#allocation5] sm:$0xff] %v80
    %83 = vst [vmem:[#allocation5 + $0x8] sm:$0xff] %v81
    // Predicated region
    $region10: #{tpu_custom_call.1} parent=1 // pred_check
      _
    $region11: #{tpu_custom_call.1} parent=1 // pred_check_branch
      %85 = sbr.rel (0) target = $region13
    $region12: #{tpu_custom_call.1} parent=1 // pred_region
      %s87 = ssub.s32 256, 256
      %88 = vsyncadd [#allocation4], %s87
      %s89 = sshll.u32 [#allocation5], 4
      %s90 = int_to_ptr.vmem [resolvable:$true] %s89
      %95 = dma.vmem_to_hbm [thread:$0]  %s90, 256, %s1, [#allocation4], 128, 128, 8
    $region13: #{tpu_custom_call.1} parent=1 // pred_fallthru
      _
    // Predicated region
    $region14: #{tpu_custom_call.1} parent=1 // pred_check
      _
    $region15: #{tpu_custom_call.1} parent=1 // pred_check_branch
      %97 = sbr.rel (0) target = $region17
    $region16: #{tpu_custom_call.1} parent=1 // pred_region
      %98 = dma.done [#allocation4], 256
    $region17: #{tpu_custom_call.1} parent=1 // pred_fallthru
      _
    %99 = vsyncpa [#allocation3], 1
    %100 = vsyncpa [#allocation4], 1

</llo_original>
